<compile_context>
chip_gen: v6e
topology: v6e:2x2x1
jax: 0.10.0
libtpu: 0.0.40
codegen_flags: <defaults>
</compile_context>

<pallas_src>
import functools

import jax
import jax.numpy as jnp
from jax import lax
from jax.experimental import pallas as pl
from jax.experimental.pallas import tpu as pltpu


# ----------------------------------------------------------------------------
# Fused kernel: K-tiled one-hot gather-matmul for image planes + masks, with
# in-kernel masks_to_boxes partials per output-column strip.
# ----------------------------------------------------------------------------
def _rotate_and_boxes_kernel(flat_src_ref, coords_ref, img_ref, msk_ref,
                             rot_img_ref, rot_msk_ref, pbox_ref,
                             acc_img_ref, acc_msk_ref):
    # flat_src_ref: (1, TN) int32   source flat index per output pixel of this
    #                               column strip; -1 => out of bounds -> zero fill
    # coords_ref  : (2, TN) f32     [x; y] coordinates of the output pixels
    # img_ref     : (BC, TK) bf16   image planes, current contraction tile
    # msk_ref     : (N, TK)  bf16   instance masks, current contraction tile
    # rot_img_ref : (BC, TN)        rotated image planes (final dtype)
    # rot_msk_ref : (N, TN)         rotated masks (final dtype)
    # pbox_ref    : (1, N, 4) f32   per-strip partial [xmin, ymin, xmax, ymax]
    # acc_*_ref   : f32 VMEM accumulators, persist across the K (reduction) axis
    k = pl.program_id(1)
    TK = img_ref.shape[1]

    @pl.when(k == 0)
    def _():
        acc_img_ref[...] = jnp.zeros_like(acc_img_ref)
        acc_msk_ref[...] = jnp.zeros_like(acc_msk_ref)

    # One-hot gather sub-block (TK, TN), built ONCE for image AND masks.
    # int32 compare (v5e has no bf16 VPU), cast straight to bf16 for the MXU;
    # no f32 select and only a (TK, 1) iota column (broadcast does the rest).
    row = lax.broadcasted_iota(jnp.int32, (TK, 1), 0) + k * TK
    onehot = (row == flat_src_ref[...]).astype(jnp.bfloat16)

    acc_img_ref[...] += jnp.dot(img_ref[...], onehot,
                                preferred_element_type=jnp.float32)
    acc_msk_ref[...] += jnp.dot(msk_ref[...], onehot,
                                preferred_element_type=jnp.float32)

    @pl.when(k == pl.num_programs(1) - 1)
    def _():
        rot_img_ref[...] = acc_img_ref[...].astype(rot_img_ref.dtype)
        rot_msk = acc_msk_ref[...]
        rot_msk_ref[...] = rot_msk.astype(rot_msk_ref.dtype)

        # masks_to_boxes partials on the just-finished rotated mask strip; the
        # tiny (S, N, 4) partials are min/max-reduced in the wrapper.
        m = rot_msk > 0.5                                   # (N, TN) bool
        xi = coords_ref[0:1, :]                             # (1, TN)
        yi = coords_ref[1:2, :]
        big = jnp.float32(1e9)
        xmin = jnp.min(jnp.where(m, xi, big), axis=1, keepdims=True)
        ymin = jnp.min(jnp.where(m, yi, big), axis=1, keepdims=True)
        xmax = jnp.max(jnp.where(m, xi, -big), axis=1, keepdims=True)
        ymax = jnp.max(jnp.where(m, yi, -big), axis=1, keepdims=True)
        pbox_ref[...] = jnp.concatenate([xmin, ymin, xmax, ymax], axis=1)[None]


def _largest_tile(K, cap):
    """Largest multiple-of-128 divisor of K that is <= cap; K itself if none."""
    cap = min(cap, K)
    t = cap - cap % 128
    while t >= 128:
        if K % t == 0:
            return t
        t -= 128
    return K


@functools.lru_cache(maxsize=1)
def _vmem_limit_bytes():
    # Generation-aware scoped-VMEM limit (~3/4 of physical, 96 MiB cap):
    # ~48 MiB on v7x (64 MiB parts), ~96 MiB on v5e/v6e (128 MiB parts).
    cap = 64 * 1024 * 1024
    try:
        cap = int(getattr(pltpu.get_tpu_info(), "vmem_capacity_bytes", cap))
    except Exception:
        pass
    return int(min(max(cap * 3 // 4, 16 * 1024 * 1024), 96 * 1024 * 1024))


def rotate_and_boxes(flat_src, coords, img2d, msk2d, img_dtype, msk_dtype):
    """img2d: (BC, K) bf16, msk2d: (N, K) bf16 ->
    (rotated image planes (BC, K) img_dtype, rotated masks (N, K) msk_dtype,
     per-strip partial boxes (S, N, 4) f32)."""
    BC, K = img2d.shape
    N = msk2d.shape[0]
    M = BC + N

    # Output-column strip TN ("parallel" axis; prefer >=2 strips so v7x's 2nd
    # TensorCore has work) and contraction tile TK ("arbitrary" axis).
    TN = _largest_tile(K, max(128, min(512, K // 2)))
    TK = _largest_tile(K, 1024)
    S, KT = K // TN, K // TK

    cost = pl.CostEstimate(
        flops=2 * M * K * K,
        transcendentals=0,
        bytes_accessed=(M * K * 2            # bf16 planes in
                        + K * 4 + 2 * K * 4  # flat_src + coords
                        + BC * K * 4 + N * K * 4  # rotated outputs
                        + S * N * 4 * 4))         # box partials

    return pl.pallas_call(
        _rotate_and_boxes_kernel,
        out_shape=(jax.ShapeDtypeStruct((BC, K), img_dtype),
                   jax.ShapeDtypeStruct((N, K), msk_dtype),
                   jax.ShapeDtypeStruct((S, N, 4), jnp.float32)),
        grid_spec=pltpu.PrefetchScalarGridSpec(
            num_scalar_prefetch=0,
            grid=(S, KT),
            in_specs=[pl.BlockSpec((1, TN), lambda j, k: (0, j)),   # flat_src
                      pl.BlockSpec((2, TN), lambda j, k: (0, j)),   # coords
                      pl.BlockSpec((BC, TK), lambda j, k: (0, k)),  # image planes
                      pl.BlockSpec((N, TK), lambda j, k: (0, k))],  # mask planes
            out_specs=(pl.BlockSpec((BC, TN), lambda j, k: (0, j)),
                       pl.BlockSpec((N, TN), lambda j, k: (0, j)),
                       pl.BlockSpec((1, N, 4), lambda j, k: (j, 0, 0))),
            scratch_shapes=[pltpu.VMEM((BC, TN), jnp.float32),
                            pltpu.VMEM((N, TN), jnp.float32)]),
        compiler_params=pltpu.CompilerParams(
            dimension_semantics=("parallel", "arbitrary"),
            vmem_limit_bytes=_vmem_limit_bytes()),
        cost_estimate=cost,
    )(flat_src, coords, img2d, msk2d)


# ----------------------------------------------------------------------------
# Module wrapper (glue in plain JAX: RNG draws, O(K) index precompute, lax.cond)
# ----------------------------------------------------------------------------
def random_rotation(key, image, target, p=0.5, angle=20.0):
    """image: (B, C, H, W) f32; target: {'masks': (N,H,W) f32, 'boxes': (N,4) f32}."""
    masks, boxes = target["masks"], target["boxes"]
    B, C, H, W = image.shape
    N = masks.shape[0]
    K = H * W

    k_prob, k_ang = jax.random.split(key)
    u = jax.random.uniform(k_prob, ())
    apply_rot = u <= p          # torch: `if rand > p: return unchanged`
    ang_deg = jax.random.uniform(k_ang, (), minval=-angle, maxval=angle)
    theta = jnp.deg2rad(ang_deg)

    def rotated_branch():
        # Hoisted O(K) index math (no int div/mod or trig inside the kernel).
        cos_t = jnp.cos(theta)
        sin_t = jnp.sin(theta)
        cx = (W - 1) * 0.5
        cy = (H - 1) * 0.5
        kk = jnp.arange(K, dtype=jnp.int32)
        xo = (kk % W).astype(jnp.float32)
        yo = (kk // W).astype(jnp.float32)
        dx = xo - cx
        dy = yo - cy
        src_x = cos_t * dx + sin_t * dy + cx           # inverse rotation
        src_y = -sin_t * dx + cos_t * dy + cy
        sx = jnp.round(src_x).astype(jnp.int32)
        sy = jnp.round(src_y).astype(jnp.int32)
        valid = (sx >= 0) & (sx < W) & (sy >= 0) & (sy < H)
        flat_src = jnp.where(valid, sy * W + sx, -1).reshape(1, K).astype(jnp.int32)
        coords = jnp.stack([xo, yo], axis=0)           # (2, K) output-pixel coords

        # bf16 is exact for 0/1 masks; image pixels take bf16 rounding (MXU-native).
        img2d = image.astype(jnp.bfloat16).reshape(B * C, K)
        msk2d = masks.astype(jnp.bfloat16).reshape(N, K)

        rot_img, rot_msk, pboxes = rotate_and_boxes(
            flat_src, coords, img2d, msk2d, image.dtype, masks.dtype)

        rot_img = rot_img.reshape(B, C, H, W)
        rot_msk = rot_msk.reshape(N, H, W)
        # Reduce the per-strip partial boxes (tiny: S x N x 4).
        xymin = jnp.min(pboxes[..., :2], axis=0)
        xymax = jnp.max(pboxes[..., 2:], axis=0)
        new_boxes = jnp.concatenate([xymin, xymax], axis=-1)
        # NOTE: a mask rotated fully out of frame yields a degenerate box,
        # matching torchvision's masks_to_boxes non-empty-mask assumption.
        return rot_img, rot_msk, new_boxes

    def passthrough():
        return image, masks, boxes.astype(jnp.float32)

    # TODO(synk): the host-level Python `if torch.rand(1) > p` branch has no
    # Pallas equivalent; under jit, lax.cond executes only the taken branch so
    # the Pallas call (and its HBM traffic) is skipped with prob (1 - p).
    img_out, masks_out, boxes_out = lax.cond(apply_rot, rotated_branch, passthrough)
    return img_out, {"masks": masks_out, "boxes": boxes_out}


# ----------------------------------------------------------------------------
if __name__ == "__main__":
    key = jax.random.PRNGKey(0)
    k_img, k_mod = jax.random.split(key)

    B, C, H, W = 2, 3, 16, 16
    N = 2
    image = jax.random.normal(k_img, (B, C, H, W), dtype=jnp.float32)

    # Two deterministic rectangular instance masks.
    yy = jnp.arange(H)[:, None]
    xx = jnp.arange(W)[None, :]
    mask0 = ((yy >= 3) & (yy <= 8) & (xx >= 4) & (xx <= 10)).astype(jnp.float32)
    mask1 = ((yy >= 9) & (yy <= 14) & (xx >= 2) & (xx <= 6)).astype(jnp.float32)
    masks = jnp.stack([mask0, mask1], axis=0)
    boxes = jnp.array([[4.0, 3.0, 10.0, 8.0],
                       [2.0, 9.0, 6.0, 14.0]], dtype=jnp.float32)
    target = {"masks": masks, "boxes": boxes}

    rr = jax.jit(lambda k, img, tgt: random_rotation(k, img, tgt, p=0.5, angle=20.0))
    img_out, tgt_out = rr(k_mod, image, target)
    jax.block_until_ready((img_out, tgt_out["masks"], tgt_out["boxes"]))

    assert img_out.shape == (B, C, H, W)
    assert tgt_out["masks"].shape == (N, H, W)
    assert tgt_out["boxes"].shape == (N, 4)
    print("KERNEL_OK")
</pallas_src>

<mosaic_0001>
module attributes {stable_mosaic.version = 11 : i64} {
  func.func @_rotate_and_boxes_kernel(%arg0: i32, %arg1: i32, %arg2: memref<1x128xi32, #tpu.memory_space<vmem>>, %arg3: memref<2x128xf32, #tpu.memory_space<vmem>>, %arg4: memref<6x256xbf16, #tpu.memory_space<vmem>>, %arg5: memref<2x256xbf16, #tpu.memory_space<vmem>>, %arg6: memref<6x128xf32, #tpu.memory_space<vmem>>, %arg7: memref<2x128xf32, #tpu.memory_space<vmem>>, %arg8: memref<1x2x4xf32, #tpu.memory_space<vmem>>, %arg9: memref<6x128xf32, #tpu.memory_space<vmem>>, %arg10: memref<2x128xf32, #tpu.memory_space<vmem>>) attributes {dimension_semantics = [#tpu.dimension_semantics<parallel>, #tpu.dimension_semantics<arbitrary>], iteration_bounds = array<i64: 2, 1>, scalar_prefetch = 0 : i64, scratch_operands = 2 : i64, tpu.core_type = #tpu.core_type<tc>, window_params = [{transform_indices = @transform_0, window_bounds = array<i64: 1, 128>}, {transform_indices = @transform_1, window_bounds = array<i64: 2, 128>}, {transform_indices = @transform_2, window_bounds = array<i64: 6, 256>}, {transform_indices = @transform_3, window_bounds = array<i64: 2, 256>}, {transform_indices = @transform_4, window_bounds = array<i64: 6, 128>}, {transform_indices = @transform_5, window_bounds = array<i64: 2, 128>}, {transform_indices = @transform_6, window_bounds = array<i64: 1, 2, 4>}]} {
    %c0_i32 = arith.constant 0 : i32
    %0 = arith.cmpi eq, %arg1, %c0_i32 : i32
    %1 = arith.extui %0 : i1 to i32
    %c0_i32_0 = arith.constant 0 : i32
    %2 = arith.cmpi ne, %1, %c0_i32_0 : i32
    scf.if %2 {
      %cst_17 = arith.constant 0.000000e+00 : f32
      %27 = vector.broadcast %cst_17 : f32 to vector<6x128xf32>
      %c0_18 = arith.constant 0 : index
      %c0_19 = arith.constant 0 : index
      %28 = vector.load %arg9[%c0_18, %c0_19] : memref<6x128xf32, #tpu.memory_space<vmem>>, vector<6x128xf32>
      tpu.vector_store %arg9[%c0_18, %c0_19], %27 {strides = array<i32>} : memref<6x128xf32, #tpu.memory_space<vmem>>, vector<6x128xf32>,
      %cst_20 = arith.constant 0.000000e+00 : f32
      %29 = vector.broadcast %cst_20 : f32 to vector<2x128xf32>
      %c0_21 = arith.constant 0 : index
      %c0_22 = arith.constant 0 : index
      %30 = vector.load %arg10[%c0_21, %c0_22] : memref<2x128xf32, #tpu.memory_space<vmem>>, vector<2x128xf32>
      tpu.vector_store %arg10[%c0_21, %c0_22], %29 {strides = array<i32>} : memref<2x128xf32, #tpu.memory_space<vmem>>, vector<2x128xf32>,
    } else {
    }
    %3 = tpu.iota {dimensions = array<i32: 0>} : vector<256x1xi32>
    %c256_i32 = arith.constant 256 : i32
    %4 = arith.muli %arg1, %c256_i32 : i32
    %5 = vector.broadcast %4 : i32 to vector<256x1xi32>
    %6 = arith.addi %3, %5 : vector<256x1xi32>
    %c0 = arith.constant 0 : index
    %c0_1 = arith.constant 0 : index
    %7 = vector.load %arg2[%c0, %c0_1] : memref<1x128xi32, #tpu.memory_space<vmem>>, vector<1x128xi32>
    %8 = vector.broadcast %6 : vector<256x1xi32> to vector<256x128xi32>
    %9 = vector.broadcast %7 : vector<1x128xi32> to vector<256x128xi32>
    %10 = arith.cmpi eq, %8, %9 : vector<256x128xi32>
    %11 = arith.extui %10 : vector<256x128xi1> to vector<256x128xi32>
    %12 = arith.sitofp %11 : vector<256x128xi32> to vector<256x128xf32>
    %13 = arith.truncf %12 : vector<256x128xf32> to vector<256x128xbf16>
    %c0_2 = arith.constant 0 : index
    %c0_3 = arith.constant 0 : index
    %14 = vector.load %arg9[%c0_2, %c0_3] : memref<6x128xf32, #tpu.memory_space<vmem>>, vector<6x128xf32>
    %c0_4 = arith.constant 0 : index
    %c0_5 = arith.constant 0 : index
    %15 = vector.load %arg4[%c0_4, %c0_5] : memref<6x256xbf16, #tpu.memory_space<vmem>>, vector<6x256xbf16>
    %cst = arith.constant dense<0.000000e+00> : vector<6x128xf32>
    %16 = tpu.matmul %15, %13, %cst {dimension_numbers = #tpu.dot_dimension_numbers<[1], [0], [0], [1], [0, 0, 1, 1], [], []>} : vector<6x256xbf16>, vector<256x128xbf16>, vector<6x128xf32> -> vector<6x128xf32>
    %17 = arith.addf %14, %16 : vector<6x128xf32>
    %c0_6 = arith.constant 0 : index
    %c0_7 = arith.constant 0 : index
    %18 = vector.load %arg9[%c0_6, %c0_7] : memref<6x128xf32, #tpu.memory_space<vmem>>, vector<6x128xf32>
    tpu.vector_store %arg9[%c0_6, %c0_7], %17 {strides = array<i32>} : memref<6x128xf32, #tpu.memory_space<vmem>>, vector<6x128xf32>,
    %c0_8 = arith.constant 0 : index
    %c0_9 = arith.constant 0 : index
    %19 = vector.load %arg10[%c0_8, %c0_9] : memref<2x128xf32, #tpu.memory_space<vmem>>, vector<2x128xf32>
    %c0_10 = arith.constant 0 : index
    %c0_11 = arith.constant 0 : index
    %20 = vector.load %arg5[%c0_10, %c0_11] : memref<2x256xbf16, #tpu.memory_space<vmem>>, vector<2x256xbf16>
    %cst_12 = arith.constant dense<0.000000e+00> : vector<2x128xf32>
    %21 = tpu.matmul %20, %13, %cst_12 {dimension_numbers = #tpu.dot_dimension_numbers<[1], [0], [0], [1], [0, 0, 1, 1], [], []>} : vector<2x256xbf16>, vector<256x128xbf16>, vector<2x128xf32> -> vector<2x128xf32>
    %22 = arith.addf %19, %21 : vector<2x128xf32>
    %c0_13 = arith.constant 0 : index
    %c0_14 = arith.constant 0 : index
    %23 = vector.load %arg10[%c0_13, %c0_14] : memref<2x128xf32, #tpu.memory_space<vmem>>, vector<2x128xf32>
    tpu.vector_store %arg10[%c0_13, %c0_14], %22 {strides = array<i32>} : memref<2x128xf32, #tpu.memory_space<vmem>>, vector<2x128xf32>,
    %c0_i32_15 = arith.constant 0 : i32
    %24 = arith.cmpi eq, %arg1, %c0_i32_15 : i32
    %25 = arith.extui %24 : i1 to i32
    %c0_i32_16 = arith.constant 0 : i32
    %26 = arith.cmpi ne, %25, %c0_i32_16 : i32
    scf.if %26 {
      %c0_17 = arith.constant 0 : index
      %c0_18 = arith.constant 0 : index
      %27 = vector.load %arg9[%c0_17, %c0_18] : memref<6x128xf32, #tpu.memory_space<vmem>>, vector<6x128xf32>
      %c0_19 = arith.constant 0 : index
      %c0_20 = arith.constant 0 : index
      %28 = vector.load %arg6[%c0_19, %c0_20] : memref<6x128xf32, #tpu.memory_space<vmem>>, vector<6x128xf32>
      tpu.vector_store %arg6[%c0_19, %c0_20], %27 {strides = array<i32>} : memref<6x128xf32, #tpu.memory_space<vmem>>, vector<6x128xf32>,
      %c0_21 = arith.constant 0 : index
      %c0_22 = arith.constant 0 : index
      %29 = vector.load %arg10[%c0_21, %c0_22] : memref<2x128xf32, #tpu.memory_space<vmem>>, vector<2x128xf32>
      %c0_23 = arith.constant 0 : index
      %c0_24 = arith.constant 0 : index
      %30 = vector.load %arg7[%c0_23, %c0_24] : memref<2x128xf32, #tpu.memory_space<vmem>>, vector<2x128xf32>
      tpu.vector_store %arg7[%c0_23, %c0_24], %29 {strides = array<i32>} : memref<2x128xf32, #tpu.memory_space<vmem>>, vector<2x128xf32>,
      %cst_25 = arith.constant 5.000000e-01 : f32
      %31 = vector.broadcast %cst_25 : f32 to vector<2x128xf32>
      %32 = arith.cmpf ogt, %29, %31 : vector<2x128xf32>
      %c0_26 = arith.constant 0 : index
      %c0_27 = arith.constant 0 : index
      %33 = vector.load %arg3[%c0_26, %c0_27] : memref<2x128xf32, #tpu.memory_space<vmem>>, vector<1x128xf32>
      %c1 = arith.constant 1 : index
      %c0_28 = arith.constant 0 : index
      %34 = vector.load %arg3[%c1, %c0_28] : memref<2x128xf32, #tpu.memory_space<vmem>>, vector<1x128xf32>
      %cst_29 = arith.constant 1.000000e+09 : f32
      %35 = vector.shape_cast %33 : vector<1x128xf32> to vector<1x128xf32>
      %36 = vector.broadcast %35 : vector<1x128xf32> to vector<2x128xf32>
      %37 = vector.broadcast %cst_29 : f32 to vector<2x128xf32>
      %38 = arith.select %32, %36, %37 : vector<2x128xi1>, vector<2x128xf32>
      %cst_30 = arith.constant dense<0x7F800000> : vector<2xf32>
      %39 = vector.multi_reduction <minimumf>, %38, %cst_30 [1] : vector<2x128xf32> to vector<2xf32>
      %40 = vector.shape_cast %39 : vector<2xf32> to vector<2x1xf32>
      %cst_31 = arith.constant 1.000000e+09 : f32
      %41 = vector.shape_cast %34 : vector<1x128xf32> to vector<1x128xf32>
      %42 = vector.broadcast %41 : vector<1x128xf32> to vector<2x128xf32>
      %43 = vector.broadcast %cst_31 : f32 to vector<2x128xf32>
      %44 = arith.select %32, %42, %43 : vector<2x128xi1>, vector<2x128xf32>
      %cst_32 = arith.constant dense<0x7F800000> : vector<2xf32>
      %45 = vector.multi_reduction <minimumf>, %44, %cst_32 [1] : vector<2x128xf32> to vector<2xf32>
      %46 = vector.shape_cast %45 : vector<2xf32> to vector<2x1xf32>
      %cst_33 = arith.constant 0.000000e+00 : f32
      %cst_34 = arith.constant 1.000000e+09 : f32
      %47 = arith.subf %cst_33, %cst_34 : f32
      %48 = vector.shape_cast %33 : vector<1x128xf32> to vector<1x128xf32>
      %49 = vector.broadcast %48 : vector<1x128xf32> to vector<2x128xf32>
      %50 = vector.broadcast %47 : f32 to vector<2x128xf32>
      %51 = arith.select %32, %49, %50 : vector<2x128xi1>, vector<2x128xf32>
      %cst_35 = arith.constant dense<0xFF800000> : vector<2xf32>
      %52 = vector.multi_reduction <maximumf>, %51, %cst_35 [1] : vector<2x128xf32> to vector<2xf32>
      %53 = vector.shape_cast %52 : vector<2xf32> to vector<2x1xf32>
      %cst_36 = arith.constant 0.000000e+00 : f32
      %cst_37 = arith.constant 1.000000e+09 : f32
      %54 = arith.subf %cst_36, %cst_37 : f32
      %55 = vector.shape_cast %34 : vector<1x128xf32> to vector<1x128xf32>
      %56 = vector.broadcast %55 : vector<1x128xf32> to vector<2x128xf32>
      %57 = vector.broadcast %54 : f32 to vector<2x128xf32>
      %58 = arith.select %32, %56, %57 : vector<2x128xi1>, vector<2x128xf32>
      %cst_38 = arith.constant dense<0xFF800000> : vector<2xf32>
      %59 = vector.multi_reduction <maximumf>, %58, %cst_38 [1] : vector<2x128xf32> to vector<2xf32>
      %60 = vector.shape_cast %59 : vector<2xf32> to vector<2x1xf32>
      %61 = tpu.concatenate %40, %46, %53, %60 in 1 : vector<2x1xf32>, vector<2x1xf32>, vector<2x1xf32>, vector<2x1xf32> -> vector<2x4xf32>
      %62 = vector.shape_cast %61 : vector<2x4xf32> to vector<1x2x4xf32>
      %c0_39 = arith.constant 0 : index
      %c0_40 = arith.constant 0 : index
      %c0_41 = arith.constant 0 : index
      %63 = vector.load %arg8[%c0_39, %c0_40, %c0_41] : memref<1x2x4xf32, #tpu.memory_space<vmem>>, vector<1x2x4xf32>
      tpu.vector_store %arg8[%c0_39, %c0_40, %c0_41], %62 {strides = array<i32>} : memref<1x2x4xf32, #tpu.memory_space<vmem>>, vector<1x2x4xf32>,
    } else {
    }
    return
  }
  func.func @transform_0(%arg0: i32, %arg1: i32) -> (i32, i32) {
    %c0_i32 = arith.constant 0 : i32
    %c0_i32_0 = arith.constant 0 : i32
    return %c0_i32, %arg0 : i32, i32
  }
  func.func @transform_1(%arg0: i32, %arg1: i32) -> (i32, i32) {
    %c0_i32 = arith.constant 0 : i32
    %c0_i32_0 = arith.constant 0 : i32
    return %c0_i32, %arg0 : i32, i32
  }
  func.func @transform_2(%arg0: i32, %arg1: i32) -> (i32, i32) {
    %c0_i32 = arith.constant 0 : i32
    %c0_i32_0 = arith.constant 0 : i32
    return %c0_i32, %arg1 : i32, i32
  }
  func.func @transform_3(%arg0: i32, %arg1: i32) -> (i32, i32) {
    %c0_i32 = arith.constant 0 : i32
    %c0_i32_0 = arith.constant 0 : i32
    return %c0_i32, %arg1 : i32, i32
  }
  func.func @transform_4(%arg0: i32, %arg1: i32) -> (i32, i32) {
    %c0_i32 = arith.constant 0 : i32
    %c0_i32_0 = arith.constant 0 : i32
    return %c0_i32, %arg0 : i32, i32
  }
  func.func @transform_5(%arg0: i32, %arg1: i32) -> (i32, i32) {
    %c0_i32 = arith.constant 0 : i32
    %c0_i32_0 = arith.constant 0 : i32
    return %c0_i32, %arg0 : i32, i32
  }
  func.func @transform_6(%arg0: i32, %arg1: i32) -> (i32, i32, i32) {
    %c0_i32 = arith.constant 0 : i32
    %c0_i32_0 = arith.constant 0 : i32
    %c0_i32_1 = arith.constant 0 : i32
    return %arg0, %c0_i32, %c0_i32_0 : i32, i32, i32
  }
}

</mosaic_0001>

<llo_original>
// kernel: branch_1_fun.3
$region0: #{branch_1_fun.3}
  #allocation0 [shape = 'u32[]', space=smem, size = 0x4, offset = 0x4, fixed_abs, tag = 'smem constant byte address 0x4 - core index']
  #allocation1 [shape = 'u32[144,128]{1,0:T(1,128)}', space=vmem, size = 0x12000, scoped, tag = 'internal scratch']
  #allocation2 [shape = 'f32[6,128]{1,0:T(8,128)}', space=vmem, size = 0x1000, scoped, tag = 'scratch operand']
  #allocation3 [shape = 'f32[2,128]{1,0:T(2,128)}', space=vmem, size = 0x400, scoped, tag = 'scratch operand']
  %s0 = inlined_call_operand.vmem [shape: s32[1,256], index: 0, kind: input, shape index: {}]
  %s1 = inlined_call_operand.vmem [shape: f32[2,256], index: 1, kind: input, shape index: {}]
  %s2 = inlined_call_operand.vmem [shape: bf16[6,256], index: 2, kind: input, shape index: {}]
  %s3 = inlined_call_operand.vmem [shape: bf16[2,256], index: 3, kind: input, shape index: {}]
  %s4 = inlined_call_operand.vmem [shape: f32[6,256], index: 4, kind: output, shape index: {0}]
  %s5 = inlined_call_operand.vmem [shape: f32[2,256], index: 5, kind: output, shape index: {1}]
  %s6 = inlined_call_operand.vmem [shape: f32[2,2,4], index: 6, kind: output, shape index: {2}]
  %7 = xla_tuple %s4, %s5, %s6
  %s8 = sld [smem:[#allocation0]]
  $region73: #{branch_1_fun.3} parent=0
    _
  %s10 = ssub.s32 1, %s8
  %s11 = scalar_select 0, %s10, %s8
  loop: start=0, step=1, limit=4
  $region2: #{branch_1_fun.3} parent=0 // loop_pre_header
    _
  $region3: #{branch_1_fun.3} parent=0 // loop_header
    %s13 = sphi 0, %s17
    %p14 = scmp.ge.s32.totalorder %s13, 4
    %s20 = sphi 0, %s32
    %s21 = sphi 0, %s28
    %s22 = sphi 0, %s20
    %s23 = sphi 0, %s21
    %s24 = sphi 0, %s22
    %s25 = sphi 0, %s23
    %s35 = sphi 0, %s37
    %s38 = sphi 0, %s35
    %s39 = sphi 0, %s38
    %s55 = sphi 0, %s39
    %s61 = sphi 0, %s63
    %s64 = sphi 0, %s61
    %s65 = sphi 0, %s64
    %s81 = sphi 0, %s65
    %s87 = sphi 0, %s89
    %s90 = sphi 0, %s87
    %s91 = sphi 0, %s90
    %s107 = sphi 0, %s91
    %s113 = sphi 0, %s115
    %s116 = sphi 0, %s113
    %s117 = sphi 0, %s116
    %s133 = sphi 0, %s117
    %s139 = sphi 0, %s141
    %s142 = sphi 0, %s139
    %s143 = sphi 0, %s142
    %s159 = sphi 0, %s143
    %s165 = sphi 0, %s167
    %s168 = sphi 0, %s165
    %s169 = sphi 0, %s168
    %s185 = sphi 0, %s169
    %s191 = sphi 0, %s193
    %s194 = sphi 0, %s191
    %s195 = sphi 0, %s194
    %s211 = sphi 0, %s195
  $region4: #{branch_1_fun.3} parent=0 // loop_header_branch
    %16 = sbr.rel (%p14) target = $region8
  $region5: #{branch_1_fun.3} parent=0 // loop_body
    %s18 = ssub.s32 %s13, 1
    %s19 = ssub.s32 %s13, 2
    %s26 = sadd.s32 1, %s21
    %p27 = scmp.ge.s32.totalorder %s26, 1
    %s28 = scalar_select %p27, 0, %s26
    %s29 = sadd.s32 1, %s20
    %s30 = scalar_select %p27, %s29, %s20
    %p31 = scmp.ge.s32.totalorder %s30, 2
    %s32 = scalar_select %p31, 0, %s30
    %s33 = ssub.s32 %s20, %s32
    %p34 = scmp.eq.s32.totalorder %s33, 0
    %s36 = sadd.s32 %s35, 1
    %s37 = scalar_select %p34, %s35, %s36
    %p40 = pneg %p34
    %p41 = scmp.eq.s32.totalorder %s13, 1
    %p42 = por %p40, %p41
    %p43 = scmp.ne.s32.totalorder %s35, %s38
    %p44 = scmp.eq.s32.totalorder %s13, 0
    %p45 = por %p43, %p44
    %p46 = scmp.ne.s32.totalorder %s35, %s38
    %p47 = scmp.eq.s32.totalorder %s18, 1
    %p48 = por %p46, %p47
    %p49 = scmp.ne.s32.totalorder %s38, %s39
    %p50 = scmp.eq.s32.totalorder %s18, 0
    %p51 = por %p49, %p50
    %p52 = scmp.ne.s32.totalorder %s38, %s39
    %p53 = scmp.eq.s32.totalorder %s19, 1
    %p54 = por %p52, %p53
    %p56 = scmp.ne.s32.totalorder %s39, %s55
    %p57 = scmp.eq.s32.totalorder %s19, 0
    %p58 = por %p56, %p57
    %s59 = ssub.s32 %s20, %s32
    %p60 = scmp.eq.s32.totalorder %s59, 0
    %s62 = sadd.s32 %s61, 1
    %s63 = scalar_select %p60, %s61, %s62
    %p66 = pneg %p60
    %p67 = scmp.eq.s32.totalorder %s13, 1
    %p68 = por %p66, %p67
    %p69 = scmp.ne.s32.totalorder %s61, %s64
    %p70 = scmp.eq.s32.totalorder %s13, 0
    %p71 = por %p69, %p70
    %p72 = scmp.ne.s32.totalorder %s61, %s64
    %p73 = scmp.eq.s32.totalorder %s18, 1
    %p74 = por %p72, %p73
    %p75 = scmp.ne.s32.totalorder %s64, %s65
    %p76 = scmp.eq.s32.totalorder %s18, 0
    %p77 = por %p75, %p76
    %p78 = scmp.ne.s32.totalorder %s64, %s65
    %p79 = scmp.eq.s32.totalorder %s19, 1
    %p80 = por %p78, %p79
    %p82 = scmp.ne.s32.totalorder %s65, %s81
    %p83 = scmp.eq.s32.totalorder %s19, 0
    %p84 = por %p82, %p83
    %s85 = ssub.s32 %s21, %s28
    %p86 = scmp.eq.s32.totalorder %s85, 0
    %s88 = sadd.s32 %s87, 1
    %s89 = scalar_select %p86, %s87, %s88
    %p92 = pneg %p86
    %p93 = scmp.eq.s32.totalorder %s13, 1
    %p94 = por %p92, %p93
    %p95 = scmp.ne.s32.totalorder %s87, %s90
    %p96 = scmp.eq.s32.totalorder %s13, 0
    %p97 = por %p95, %p96
    %p98 = scmp.ne.s32.totalorder %s87, %s90
    %p99 = scmp.eq.s32.totalorder %s18, 1
    %p100 = por %p98, %p99
    %p101 = scmp.ne.s32.totalorder %s90, %s91
    %p102 = scmp.eq.s32.totalorder %s18, 0
    %p103 = por %p101, %p102
    %p104 = scmp.ne.s32.totalorder %s90, %s91
    %p105 = scmp.eq.s32.totalorder %s19, 1
    %p106 = por %p104, %p105
    %p108 = scmp.ne.s32.totalorder %s91, %s107
    %p109 = scmp.eq.s32.totalorder %s19, 0
    %p110 = por %p108, %p109
    %s111 = ssub.s32 %s21, %s28
    %p112 = scmp.eq.s32.totalorder %s111, 0
    %s114 = sadd.s32 %s113, 1
    %s115 = scalar_select %p112, %s113, %s114
    %p118 = pneg %p112
    %p119 = scmp.eq.s32.totalorder %s13, 1
    %p120 = por %p118, %p119
    %p121 = scmp.ne.s32.totalorder %s113, %s116
    %p122 = scmp.eq.s32.totalorder %s13, 0
    %p123 = por %p121, %p122
    %p124 = scmp.ne.s32.totalorder %s113, %s116
    %p125 = scmp.eq.s32.totalorder %s18, 1
    %p126 = por %p124, %p125
    %p127 = scmp.ne.s32.totalorder %s116, %s117
    %p128 = scmp.eq.s32.totalorder %s18, 0
    %p129 = por %p127, %p128
    %p130 = scmp.ne.s32.totalorder %s116, %s117
    %p131 = scmp.eq.s32.totalorder %s19, 1
    %p132 = por %p130, %p131
    %p134 = scmp.ne.s32.totalorder %s117, %s133
    %p135 = scmp.eq.s32.totalorder %s19, 0
    %p136 = por %p134, %p135
    %s137 = ssub.s32 %s20, %s32
    %p138 = scmp.eq.s32.totalorder %s137, 0
    %s140 = sadd.s32 %s139, 1
    %s141 = scalar_select %p138, %s139, %s140
    %p144 = pneg %p138
    %p145 = scmp.eq.s32.totalorder %s13, 1
    %p146 = por %p144, %p145
    %p147 = scmp.ne.s32.totalorder %s139, %s142
    %p148 = scmp.eq.s32.totalorder %s13, 0
    %p149 = por %p147, %p148
    %p150 = scmp.ne.s32.totalorder %s139, %s142
    %p151 = scmp.eq.s32.totalorder %s18, 1
    %p152 = por %p150, %p151
    %p153 = scmp.ne.s32.totalorder %s142, %s143
    %p154 = scmp.eq.s32.totalorder %s18, 0
    %p155 = por %p153, %p154
    %p156 = scmp.ne.s32.totalorder %s142, %s143
    %p157 = scmp.eq.s32.totalorder %s19, 1
    %p158 = por %p156, %p157
    %p160 = scmp.ne.s32.totalorder %s143, %s159
    %p161 = scmp.eq.s32.totalorder %s19, 0
    %p162 = por %p160, %p161
    %s163 = ssub.s32 %s20, %s32
    %p164 = scmp.eq.s32.totalorder %s163, 0
    %s166 = sadd.s32 %s165, 1
    %s167 = scalar_select %p164, %s165, %s166
    %p170 = pneg %p164
    %p171 = scmp.eq.s32.totalorder %s13, 1
    %p172 = por %p170, %p171
    %p173 = scmp.ne.s32.totalorder %s165, %s168
    %p174 = scmp.eq.s32.totalorder %s13, 0
    %p175 = por %p173, %p174
    %p176 = scmp.ne.s32.totalorder %s165, %s168
    %p177 = scmp.eq.s32.totalorder %s18, 1
    %p178 = por %p176, %p177
    %p179 = scmp.ne.s32.totalorder %s168, %s169
    %p180 = scmp.eq.s32.totalorder %s18, 0
    %p181 = por %p179, %p180
    %p182 = scmp.ne.s32.totalorder %s168, %s169
    %p183 = scmp.eq.s32.totalorder %s19, 1
    %p184 = por %p182, %p183
    %p186 = scmp.ne.s32.totalorder %s169, %s185
    %p187 = scmp.eq.s32.totalorder %s19, 0
    %p188 = por %p186, %p187
    %s189 = ssub.s32 %s20, %s32
    %p190 = scmp.eq.s32.totalorder %s189, 0
    %s192 = sadd.s32 %s191, 1
    %s193 = scalar_select %p190, %s191, %s192
    %p196 = pneg %p190
    %p197 = scmp.eq.s32.totalorder %s13, 1
    %p198 = por %p196, %p197
    %p199 = scmp.ne.s32.totalorder %s191, %s194
    %p200 = scmp.eq.s32.totalorder %s13, 0
    %p201 = por %p199, %p200
    %p202 = scmp.ne.s32.totalorder %s191, %s194
    %p203 = scmp.eq.s32.totalorder %s18, 1
    %p204 = por %p202, %p203
    %p205 = scmp.ne.s32.totalorder %s194, %s195
    %p206 = scmp.eq.s32.totalorder %s18, 0
    %p207 = por %p205, %p206
    %p208 = scmp.ne.s32.totalorder %s194, %s195
    %p209 = scmp.eq.s32.totalorder %s19, 1
    %p210 = por %p208, %p209
    %p212 = scmp.ne.s32.totalorder %s195, %s211
    %p213 = scmp.eq.s32.totalorder %s19, 0
    %p214 = por %p212, %p213
    %p215 = scmp.le.s32.totalorder 1, %s13
    %p216 = scmp.lt.s32.totalorder %s13, 3
    %p217 = pnand %p215, %p216
    %p218 = pneg %p217
    // Predicated region
    $region9: #{branch_1_fun.3} parent=5 // pred_check
      _
    $region10: #{branch_1_fun.3} parent=5 // pred_check_branch
      %220 = sbr.rel (%p217) target = $region12
    $region11: #{branch_1_fun.3} parent=5 // pred_region
      %s221 = ssub.s32 %s13, 1
      // Predicated region
      $region13: #{branch_1_fun.3} parent=11 // pred_check
        %p222 = pneg %p103
      $region14: #{branch_1_fun.3} parent=11 // pred_check_branch
        %224 = sbr.rel (%p222) target = $region16
      $region15: #{branch_1_fun.3} parent=11 // pred_region
        %s225 = smul.u32 2, %s23
        %p226 = scmp.lt.s32.totalorder %s225, 1
        %s227 = scalar_select %p226, %s225, 1
        %s228 = smul.addr %s227, 4
        %s229 = scalar_lea.vmem %s2, %s228
        %s230 = smul.u32 2, %s23
      $region16: #{branch_1_fun.3} parent=11 // pred_fallthru
        _
      // Predicated region
      $region17: #{branch_1_fun.3} parent=11 // pred_check
        %p231 = pneg %p129
      $region18: #{branch_1_fun.3} parent=11 // pred_check_branch
        %233 = sbr.rel (%p231) target = $region20
      $region19: #{branch_1_fun.3} parent=11 // pred_region
        %s234 = smul.u32 2, %s23
        %p235 = scmp.lt.s32.totalorder %s234, 1
        %s236 = scalar_select %p235, %s234, 1
        %s237 = scalar_lea.vmem %s3, %s236
        %s238 = smul.u32 2, %s23
      $region20: #{branch_1_fun.3} parent=11 // pred_fallthru
        _
    $region12: #{branch_1_fun.3} parent=5 // pred_fallthru
      _
    %p239 = scmp.lt.s32.totalorder %s13, 2
    // Predicated region
    $region21: #{branch_1_fun.3} parent=5 // pred_check
      %p240 = pneg %p239
    $region22: #{branch_1_fun.3} parent=5 // pred_check_branch
      %242 = sbr.rel (%p240) target = $region24
    $region23: #{branch_1_fun.3} parent=5 // pred_region
      // Predicated region
      $region25: #{branch_1_fun.3} parent=23 // pred_check
        %p243 = pneg %p45
      $region26: #{branch_1_fun.3} parent=23 // pred_check_branch
        %245 = sbr.rel (%p243) target = $region28
      $region27: #{branch_1_fun.3} parent=23 // pred_region
        %p246 = scmp.lt.s32.totalorder %s20, 1
        %s247 = scalar_select %p246, %s20, 1
        %s248 = scalar_lea.vmem %s0, %s247
      $region28: #{branch_1_fun.3} parent=23 // pred_fallthru
        _
      // Predicated region
      $region29: #{branch_1_fun.3} parent=23 // pred_check
        %p249 = pneg %p71
      $region30: #{branch_1_fun.3} parent=23 // pred_check_branch
        %251 = sbr.rel (%p249) target = $region32
      $region31: #{branch_1_fun.3} parent=23 // pred_region
        %p252 = scmp.lt.s32.totalorder %s20, 1
        %s253 = scalar_select %p252, %s20, 1
        %s254 = smul.addr %s253, 2
        %s255 = scalar_lea.vmem %s1, %s254
      $region32: #{branch_1_fun.3} parent=23 // pred_fallthru
        _
    $region24: #{branch_1_fun.3} parent=5 // pred_fallthru
      _
    %p256 = scmp.le.s32.totalorder 1, %s13
    %p257 = scmp.lt.s32.totalorder %s13, 3
    %p258 = pnand %p256, %p257
    %p259 = pneg %p258
    // Predicated region
    $region33: #{branch_1_fun.3} parent=5 // pred_check
      _
    $region34: #{branch_1_fun.3} parent=5 // pred_check_branch
      %261 = sbr.rel (%p258) target = $region36
    $region35: #{branch_1_fun.3} parent=5 // pred_region
      %s262 = ssub.s32 %s13, 1
      %p263 = scmp.lt.s32.totalorder %s22, 1
      %s264 = scalar_select %p263, %s22, 1
      %s265 = scalar_lea.vmem %s0, %s264
      %p266 = pneg %p51
      %p267 = pneg %p48
      %p268 = scmp.lt.s32.totalorder %s22, 1
      %s269 = scalar_select %p268, %s22, 1
      %s270 = smul.addr %s269, 2
      %s271 = scalar_lea.vmem %s1, %s270
      %p272 = pneg %p77
      %p273 = pneg %p74
      %s274 = smul.u32 2, %s23
      %p275 = scmp.lt.s32.totalorder %s274, 1
      %s276 = scalar_select %p275, %s274, 1
      %s277 = smul.addr %s276, 4
      %s278 = scalar_lea.vmem %s2, %s277
      %p279 = pneg %p103
      %p280 = pneg %p100
      %s281 = smul.u32 2, %s23
      %p282 = scmp.lt.s32.totalorder %s281, 1
      %s283 = scalar_select %p282, %s281, 1
      %s284 = scalar_lea.vmem %s3, %s283
      %p285 = pneg %p129
      %p286 = pneg %p126
      %p287 = pneg %p155
      %p288 = pneg %p152
      %p289 = scmp.lt.s32.totalorder %s22, 1
      %s290 = scalar_select %p289, %s22, 1
      %s291 = smul.addr %s290, 8
      %s292 = scalar_lea.vmem %s4, %s291
      %p293 = pneg %p181
      %p294 = pneg %p178
      %p295 = scmp.lt.s32.totalorder %s22, 1
      %s296 = scalar_select %p295, %s22, 1
      %s297 = smul.addr %s296, 2
      %s298 = scalar_lea.vmem %s5, %s297
      %p299 = pneg %p207
      %p300 = pneg %p204
      %p301 = scmp.lt.s32.totalorder %s22, 1
      %s302 = scalar_select %p301, %s22, 1
      %s303 = smul.addr %s302, 2
      %s304 = scalar_lea.vmem %s6, %s303
      %p305 = scmp.lt.s32.totalorder %s22, 1
      %s306 = scalar_select %p305, %s22, 1
      %s307 = scalar_lea.vmem %s0, %s306
      %p308 = scmp.lt.s32.totalorder %s22, 1
      %s309 = scalar_select %p308, %s22, 1
      %s310 = smul.addr %s309, 2
      %s311 = scalar_lea.vmem %s1, %s310
      %s312 = smul.u32 2, %s23
      %p313 = scmp.lt.s32.totalorder %s312, 1
      %s314 = scalar_select %p313, %s312, 1
      %s315 = smul.addr %s314, 4
      %s316 = scalar_lea.vmem %s2, %s315
      %s317 = smul.u32 2, %s23
      %s318 = smul.u32 2, %s23
      %p319 = scmp.lt.s32.totalorder %s318, 1
      %s320 = scalar_select %p319, %s318, 1
      %s321 = scalar_lea.vmem %s3, %s320
      %s322 = smul.u32 2, %s23
      %p323 = scmp.lt.s32.totalorder %s22, 1
      %s324 = scalar_select %p323, %s22, 1
      %s325 = smul.addr %s324, 8
      %s326 = scalar_lea.vmem %s4, %s325
      %p327 = scmp.lt.s32.totalorder %s22, 1
      %s328 = scalar_select %p327, %s22, 1
      %s329 = smul.addr %s328, 2
      %s330 = scalar_lea.vmem %s5, %s329
      %p331 = scmp.lt.s32.totalorder %s22, 1
      %s332 = scalar_select %p331, %s22, 1
      %s333 = smul.addr %s332, 2
      %s334 = scalar_lea.vmem %s6, %s333
      %p336 = scmp.eq.s32.totalorder %s23, 0
      // Predicated region
      $region37: #{branch_1_fun.3} parent=35 // pred_check
        %p337 = pneg %p336
      $region38: #{branch_1_fun.3} parent=35 // pred_check_branch
        %339 = sbr.rel (%p337) target = $region40
      $region39: #{branch_1_fun.3} parent=35 // pred_region
        %340 = vst [vmem:[#allocation2] sm:$0x3f] 0.0
        %341 = vst [vmem:[#allocation3] sm:$0x3] 0.0
      $region40: #{branch_1_fun.3} parent=35 // pred_fallthru
        _
      %v342 = vlaneseq
      %v343 = vshrl.u32 %v342, 7
      %v344 = vadd.s32 %v343, 8
      %v345 = vadd.s32 %v343, 16
      %v346 = vadd.s32 %v343, 24
      %v347 = vadd.s32 %v343, 32
      %v348 = vadd.s32 %v343, 40
      %v349 = vadd.s32 %v343, 48
      %v350 = vadd.s32 %v343, 56
      %v351 = vadd.s32 %v343, 64
      %v352 = vadd.s32 %v343, 72
      %v353 = vadd.s32 %v343, 80
      %v354 = vadd.s32 %v343, 88
      %v355 = vadd.s32 %v343, 96
      %v356 = vadd.s32 %v343, 104
      %v357 = vadd.s32 %v343, 112
      %v358 = vadd.s32 %v343, 120
      %v359 = vadd.s32 %v343, 128
      %v360 = vadd.s32 %v343, 136
      %v361 = vadd.s32 %v343, 144
      %v362 = vadd.s32 %v343, 152
      %v363 = vadd.s32 %v343, 160
      %v364 = vadd.s32 %v343, 168
      %v365 = vadd.s32 %v343, 176
      %v366 = vadd.s32 %v343, 184
      %v367 = vadd.s32 %v343, 192
      %v368 = vadd.s32 %v343, 200
      %v369 = vadd.s32 %v343, 208
      %v370 = vadd.s32 %v343, 216
      %v371 = vadd.s32 %v343, 224
      %v372 = vadd.s32 %v343, 232
      %v373 = vadd.s32 %v343, 240
      %v374 = vadd.s32 %v343, 248
      %s375 = smul.u32 %s23, 256
      %v376 = vstv %s375
      %v377 = vadd.s32 %v343, %v376
      %v378 = vadd.s32 %v344, %v376
      %v379 = vadd.s32 %v345, %v376
      %v380 = vadd.s32 %v346, %v376
      %v381 = vadd.s32 %v347, %v376
      %v382 = vadd.s32 %v348, %v376
      %v383 = vadd.s32 %v349, %v376
      %v384 = vadd.s32 %v350, %v376
      %v385 = vadd.s32 %v351, %v376
      %v386 = vadd.s32 %v352, %v376
      %v387 = vadd.s32 %v353, %v376
      %v388 = vadd.s32 %v354, %v376
      %v389 = vadd.s32 %v355, %v376
      %v390 = vadd.s32 %v356, %v376
      %v391 = vadd.s32 %v357, %v376
      %v392 = vadd.s32 %v358, %v376
      %v393 = vadd.s32 %v359, %v376
      %v394 = vadd.s32 %v360, %v376
      %v395 = vadd.s32 %v361, %v376
      %v396 = vadd.s32 %v362, %v376
      %v397 = vadd.s32 %v363, %v376
      %v398 = vadd.s32 %v364, %v376
      %v399 = vadd.s32 %v365, %v376
      %v400 = vadd.s32 %v366, %v376
      %v401 = vadd.s32 %v367, %v376
      %v402 = vadd.s32 %v368, %v376
      %v403 = vadd.s32 %v369, %v376
      %v404 = vadd.s32 %v370, %v376
      %v405 = vadd.s32 %v371, %v376
      %v406 = vadd.s32 %v372, %v376
      %v407 = vadd.s32 %v373, %v376
      %v408 = vadd.s32 %v374, %v376
      %v409 = vld [vmem:[%s307] sm:$0x1]
      %v410 = vlaneseq
      %v411 = vshrl.u32 %v410, 7
      %v412 = vsub.s32 0, %v411
      %v413 = vrot.slane %v409, %v412
      %vm414 = vcmp.eq.s32.totalorder %v377, %v413
      %vm415 = vcmp.eq.s32.totalorder %v378, %v413
      %vm416 = vcmp.eq.s32.totalorder %v379, %v413
      %vm417 = vcmp.eq.s32.totalorder %v380, %v413
      %vm418 = vcmp.eq.s32.totalorder %v381, %v413
      %vm419 = vcmp.eq.s32.totalorder %v382, %v413
      %vm420 = vcmp.eq.s32.totalorder %v383, %v413
      %vm421 = vcmp.eq.s32.totalorder %v384, %v413
      %vm422 = vcmp.eq.s32.totalorder %v385, %v413
      %vm423 = vcmp.eq.s32.totalorder %v386, %v413
      %vm424 = vcmp.eq.s32.totalorder %v387, %v413
      %vm425 = vcmp.eq.s32.totalorder %v388, %v413
      %vm426 = vcmp.eq.s32.totalorder %v389, %v413
      %vm427 = vcmp.eq.s32.totalorder %v390, %v413
      %vm428 = vcmp.eq.s32.totalorder %v391, %v413
      %vm429 = vcmp.eq.s32.totalorder %v392, %v413
      %vm430 = vcmp.eq.s32.totalorder %v393, %v413
      %vm431 = vcmp.eq.s32.totalorder %v394, %v413
      %vm432 = vcmp.eq.s32.totalorder %v395, %v413
      %vm433 = vcmp.eq.s32.totalorder %v396, %v413
      %vm434 = vcmp.eq.s32.totalorder %v397, %v413
      %vm435 = vcmp.eq.s32.totalorder %v398, %v413
      %vm436 = vcmp.eq.s32.totalorder %v399, %v413
      %vm437 = vcmp.eq.s32.totalorder %v400, %v413
      %vm438 = vcmp.eq.s32.totalorder %v401, %v413
      %vm439 = vcmp.eq.s32.totalorder %v402, %v413
      %vm440 = vcmp.eq.s32.totalorder %v403, %v413
      %vm441 = vcmp.eq.s32.totalorder %v404, %v413
      %vm442 = vcmp.eq.s32.totalorder %v405, %v413
      %vm443 = vcmp.eq.s32.totalorder %v406, %v413
      %vm444 = vcmp.eq.s32.totalorder %v407, %v413
      %vm445 = vcmp.eq.s32.totalorder %v408, %v413
      %v446 = vsel %vm414, 1, 0
      %v447 = vsel %vm415, 1, 0
      %v448 = vsel %vm416, 1, 0
      %v449 = vsel %vm417, 1, 0
      %v450 = vsel %vm418, 1, 0
      %v451 = vsel %vm419, 1, 0
      %v452 = vsel %vm420, 1, 0
      %v453 = vsel %vm421, 1, 0
      %v454 = vsel %vm422, 1, 0
      %v455 = vsel %vm423, 1, 0
      %v456 = vsel %vm424, 1, 0
      %v457 = vsel %vm425, 1, 0
      %v458 = vsel %vm426, 1, 0
      %v459 = vsel %vm427, 1, 0
      %v460 = vsel %vm428, 1, 0
      %v461 = vsel %vm429, 1, 0
      %v462 = vsel %vm430, 1, 0
      %v463 = vsel %vm431, 1, 0
      %v464 = vsel %vm432, 1, 0
      %v465 = vsel %vm433, 1, 0
      %v466 = vsel %vm434, 1, 0
      %v467 = vsel %vm435, 1, 0
      %v468 = vsel %vm436, 1, 0
      %v469 = vsel %vm437, 1, 0
      %v470 = vsel %vm438, 1, 0
      %v471 = vsel %vm439, 1, 0
      %v472 = vsel %vm440, 1, 0
      %v473 = vsel %vm441, 1, 0
      %v474 = vsel %vm442, 1, 0
      %v475 = vsel %vm443, 1, 0
      %v476 = vsel %vm444, 1, 0
      %v477 = vsel %vm445, 1, 0
      %v478 = vcvt.s32.f32 %v446
      %v479 = vcvt.s32.f32 %v447
      %v480 = vcvt.s32.f32 %v448
      %v481 = vcvt.s32.f32 %v449
      %v482 = vcvt.s32.f32 %v450
      %v483 = vcvt.s32.f32 %v451
      %v484 = vcvt.s32.f32 %v452
      %v485 = vcvt.s32.f32 %v453
      %v486 = vcvt.s32.f32 %v454
      %v487 = vcvt.s32.f32 %v455
      %v488 = vcvt.s32.f32 %v456
      %v489 = vcvt.s32.f32 %v457
      %v490 = vcvt.s32.f32 %v458
      %v491 = vcvt.s32.f32 %v459
      %v492 = vcvt.s32.f32 %v460
      %v493 = vcvt.s32.f32 %v461
      %v494 = vcvt.s32.f32 %v462
      %v495 = vcvt.s32.f32 %v463
      %v496 = vcvt.s32.f32 %v464
      %v497 = vcvt.s32.f32 %v465
      %v498 = vcvt.s32.f32 %v466
      %v499 = vcvt.s32.f32 %v467
      %v500 = vcvt.s32.f32 %v468
      %v501 = vcvt.s32.f32 %v469
      %v502 = vcvt.s32.f32 %v470
      %v503 = vcvt.s32.f32 %v471
      %v504 = vcvt.s32.f32 %v472
      %v505 = vcvt.s32.f32 %v473
      %v506 = vcvt.s32.f32 %v474
      %v507 = vcvt.s32.f32 %v475
      %v508 = vcvt.s32.f32 %v476
      %v509 = vcvt.s32.f32 %v477
      %v510 = vpack.c.bf16 %v479, %v478
      %v511 = vpack.c.bf16 %v481, %v480
      %v512 = vpack.c.bf16 %v483, %v482
      %v513 = vpack.c.bf16 %v485, %v484
      %v514 = vpack.c.bf16 %v487, %v486
      %v515 = vpack.c.bf16 %v489, %v488
      %v516 = vpack.c.bf16 %v491, %v490
      %v517 = vpack.c.bf16 %v493, %v492
      %v518 = vpack.c.bf16 %v495, %v494
      %v519 = vpack.c.bf16 %v497, %v496
      %v520 = vpack.c.bf16 %v499, %v498
      %v521 = vpack.c.bf16 %v501, %v500
      %v522 = vpack.c.bf16 %v503, %v502
      %v523 = vpack.c.bf16 %v505, %v504
      %v524 = vpack.c.bf16 %v507, %v506
      %v525 = vpack.c.bf16 %v509, %v508
      %v526 = vld [vmem:[#allocation2] sm:$0x3f]
      %v527 = vld [vmem:[%s316] sm:$0x77]
      %v529 = vunpack.c.l.b16 %v527
      %v530 = vunpack.c.h.b16 %v527
      %v531 = vpack.c.b16 %v529, %v529
      %v532 = vpack.c.b16 %v530, %v530
      %535 = vmatprep.subr.bf16.mxu0 0
      %536 = vmatpush1.bf16.msra.mxu0 %v517
      %537 = vmatprep.subr.bf16.mxu0 0
      %538 = vmatpush1.bf16.msra.mxu0 %v516
      %539 = vmatprep.subr.bf16.mxu0 0
      %540 = vmatpush1.bf16.msra.mxu0 %v515
      %541 = vmatprep.subr.bf16.mxu0 0
      %542 = vmatpush1.bf16.msra.mxu0 %v514
      %543 = vmatprep.subr.bf16.mxu0 0
      %544 = vmatpush1.bf16.msra.mxu0 %v513
      %545 = vmatprep.subr.bf16.mxu0 0
      %546 = vmatpush1.bf16.msra.mxu0 %v512
      %547 = vmatprep.subr.bf16.mxu0 0
      %548 = vmatpush1.bf16.msra.mxu0 %v511
      %549 = vmatprep.subr.bf16.mxu0 0
      %550 = vmatpush1.bf16.msra.mxu0 %v510
      %551 = vmatprep.subr.bf16.mxu0 0
      %552 = vmatpush2.bf16.msra.mxu0 %v525
      %553 = vmatprep.subr.bf16.mxu0 0
      %554 = vmatpush2.bf16.msra.mxu0 %v524
      %555 = vmatprep.subr.bf16.mxu0 0
      %556 = vmatpush2.bf16.msra.mxu0 %v523
      %557 = vmatprep.subr.bf16.mxu0 0
      %558 = vmatpush2.bf16.msra.mxu0 %v522
      %559 = vmatprep.subr.bf16.mxu0 0
      %560 = vmatpush2.bf16.msra.mxu0 %v521
      %561 = vmatprep.subr.bf16.mxu0 0
      %562 = vmatpush2.bf16.msra.mxu0 %v520
      %563 = vmatprep.subr.bf16.mxu0 0
      %564 = vmatpush2.bf16.msra.mxu0 %v519
      %565 = vmatprep.subr.bf16.mxu0 0
      %566 = vmatpush2.bf16.msra.mxu0 %v518
      %567 = vmatprep.mubr.bf16.mxu0 %v532
      %568 = vmatmul.mubr.bf16.gmra.mxu0 %v531
      %v569 = vpop.f32.mrf.mxu0
      %v570 = vadd.f32 0.0, %v569
      %v571 = vpop.f32.mrf.mxu0
      %v572 = vpop.f32.mrf.mxu0
      %v573 = vpop.f32.mrf.mxu0
      %574 = vdwg.mxu0
      %v575 = vadd.f32 %v526, %v570
      %576 = vst [vmem:[#allocation2] sm:$0x3f] %v575
      %v577 = vld [vmem:[#allocation3] sm:$0x3]
      %v578 = vld [vmem:[%s321] sm:$0x3]
      %v581 = vunpack.c.l.s4 1966171168
      %v582 = vunpack.c.0.s8 %v581
      %v583 = vlaneseq
      %v584 = vshrl.u32 %v583, 7
      %v585 = vsub.s32 %v582, %v584
      %v586 = vrot.slane %v578, %v585
      %v587 = vcombine.high %v586, %v586
      %v589 = vunpack.c.l.s4 1966171168
      %v590 = vunpack.c.0.s8 %v589
      %v591 = vlaneseq
      %v592 = vshrl.u32 %v591, 7
      %v593 = vsub.s32 %v590, %v592
      %v594 = vrot.slane %v586, %v593
      %v596 = vunpack.c.l.s4 1966171168
      %v597 = vunpack.c.0.s8 %v596
      %v598 = vlaneseq
      %v599 = vshrl.u32 %v598, 7
      %v600 = vsub.s32 %v597, %v599
      %v601 = vrot.slane %v587, %v600
      %604 = vmatprep.subr.bf16.mxu0 0
      %605 = vmatpush1.bf16.msra.mxu0 %v517
      %606 = vmatprep.subr.bf16.mxu0 0
      %607 = vmatpush1.bf16.msra.mxu0 %v516
      %608 = vmatprep.subr.bf16.mxu0 0
      %609 = vmatpush1.bf16.msra.mxu0 %v515
      %610 = vmatprep.subr.bf16.mxu0 0
      %611 = vmatpush1.bf16.msra.mxu0 %v514
      %612 = vmatprep.subr.bf16.mxu0 0
      %613 = vmatpush1.bf16.msra.mxu0 %v513
      %614 = vmatprep.subr.bf16.mxu0 0
      %615 = vmatpush1.bf16.msra.mxu0 %v512
      %616 = vmatprep.subr.bf16.mxu0 0
      %617 = vmatpush1.bf16.msra.mxu0 %v511
      %618 = vmatprep.subr.bf16.mxu0 0
      %619 = vmatpush1.bf16.msra.mxu0 %v510
      %620 = vmatprep.subr.bf16.mxu0 0
      %621 = vmatpush2.bf16.msra.mxu0 %v525
      %622 = vmatprep.subr.bf16.mxu0 0
      %623 = vmatpush2.bf16.msra.mxu0 %v524
      %624 = vmatprep.subr.bf16.mxu0 0
      %625 = vmatpush2.bf16.msra.mxu0 %v523
      %626 = vmatprep.subr.bf16.mxu0 0
      %627 = vmatpush2.bf16.msra.mxu0 %v522
      %628 = vmatprep.subr.bf16.mxu0 0
      %629 = vmatpush2.bf16.msra.mxu0 %v521
      %630 = vmatprep.subr.bf16.mxu0 0
      %631 = vmatpush2.bf16.msra.mxu0 %v520
      %632 = vmatprep.subr.bf16.mxu0 0
      %633 = vmatpush2.bf16.msra.mxu0 %v519
      %634 = vmatprep.subr.bf16.mxu0 0
      %635 = vmatpush2.bf16.msra.mxu0 %v518
      %636 = vmatprep.mubr.bf16.mxu0 %v601
      %637 = vmatmul.mubr.bf16.gmra.mxu0 %v594
      %v638 = vpop.f32.mrf.mxu0
      %v639 = vadd.f32 0.0, %v638
      %v640 = vpop.f32.mrf.mxu0
      %v641 = vpop.f32.mrf.mxu0
      %v642 = vpop.f32.mrf.mxu0
      %643 = vdwg.mxu0
      %v644 = vadd.f32 %v577, %v639
      %645 = vst [vmem:[#allocation3] sm:$0x3] %v644
      // Predicated region
      $region41: #{branch_1_fun.3} parent=35 // pred_check
        %p646 = pneg %p336
      $region42: #{branch_1_fun.3} parent=35 // pred_check_branch
        %648 = sbr.rel (%p646) target = $region44
      $region43: #{branch_1_fun.3} parent=35 // pred_region
        %v649 = vld [vmem:[#allocation2] sm:$0x3f]
        %650 = vst [vmem:[%s326] sm:$0x3f] %v649
        %v651 = vld [vmem:[#allocation3] sm:$0x3]
        %652 = vst [vmem:[%s330] sm:$0x3] %v651
        %vm653 = vcmp.gt.f32.partialorder %v651, 0.5
        %v654 = vld [vmem:[%s311] sm:$0x1]
        %v655 = vld [vmem:[%s311 + $0x1] sm:$0x1]
        %v656 = vlaneseq
        %v657 = vshrl.u32 %v656, 7
        %v658 = vsub.s32 0, %v657
        %v659 = vrot.slane %v654, %v658
        %v660 = vsel %vm653, %v659, 1e+09
        %vm661 = vcmask 1041408
        %v662 = vsel %vm661, %v660, inf
        %663 = vmin.xlane.f32.xlu0 %v662
        %v664 = vpop.xlane.xlu0 %663
        %v665 = vlaneseq
        %v666 = vshrl.u32 %v665, 7
        %v667 = vsub.s32 0, %v666
        %v668 = vrot.slane %v655, %v667
        %v669 = vsel %vm653, %v668, 1e+09
        %v670 = vsel %vm661, %v669, inf
        %671 = vmin.xlane.f32.xlu0 %v670
        %v672 = vpop.xlane.xlu0 %671
        %v673 = vsel %vm653, %v659, -1e+09
        %v674 = vsel %vm661, %v673, -inf
        %675 = vmax.xlane.f32.xlu0 %v674
        %v676 = vpop.xlane.xlu0 %675
        %v677 = vsel %vm653, %v668, -1e+09
        %v678 = vsel %vm661, %v677, -inf
        %679 = vmax.xlane.f32.xlu0 %v678
        %v680 = vpop.xlane.xlu0 %679
        %vm681 = vcmask 7168
        %v682 = vsel %vm681, %v664, %v672
        %vm683 = vcmask 15360
        %v684 = vsel %vm683, %v682, %v676
        %vm685 = vcmask 23552
        %v686 = vsel %vm685, %v684, %v680
        %vm687 = vcmask 25600
        %688 = vst.msk [vmem:[%s334] sm:$0x3] %vm687, %v686
      $region44: #{branch_1_fun.3} parent=35 // pred_fallthru
        _
      %p689 = scmp.lt.s32.totalorder %s22, 1
      %s690 = scalar_select %p689, %s22, 1
      %s691 = smul.addr %s690, 8
      %s692 = scalar_lea.vmem %s4, %s691
      %p693 = scmp.lt.s32.totalorder %s22, 1
      %s694 = scalar_select %p693, %s22, 1
      %s695 = smul.addr %s694, 2
      %s696 = scalar_lea.vmem %s5, %s695
      %p697 = scmp.lt.s32.totalorder %s22, 1
      %s698 = scalar_select %p697, %s22, 1
      %s699 = smul.addr %s698, 2
      %s700 = scalar_lea.vmem %s6, %s699
      // Predicated region
      $region45: #{branch_1_fun.3} parent=35 // pred_check
        %p701 = pneg %p152
      $region46: #{branch_1_fun.3} parent=35 // pred_check_branch
        %703 = sbr.rel (%p701) target = $region48
      $region47: #{branch_1_fun.3} parent=35 // pred_region
        _
      $region48: #{branch_1_fun.3} parent=35 // pred_fallthru
        _
      // Predicated region
      $region49: #{branch_1_fun.3} parent=35 // pred_check
        %p704 = pneg %p178
      $region50: #{branch_1_fun.3} parent=35 // pred_check_branch
        %706 = sbr.rel (%p704) target = $region52
      $region51: #{branch_1_fun.3} parent=35 // pred_region
        _
      $region52: #{branch_1_fun.3} parent=35 // pred_fallthru
        _
      // Predicated region
      $region53: #{branch_1_fun.3} parent=35 // pred_check
        %p707 = pneg %p204
      $region54: #{branch_1_fun.3} parent=35 // pred_check_branch
        %709 = sbr.rel (%p707) target = $region56
      $region55: #{branch_1_fun.3} parent=35 // pred_region
        _
      $region56: #{branch_1_fun.3} parent=35 // pred_fallthru
        _
    $region36: #{branch_1_fun.3} parent=5 // pred_fallthru
      _
    %p710 = scmp.le.s32.totalorder 2, %s13
    // Predicated region
    $region57: #{branch_1_fun.3} parent=5 // pred_check
      %p711 = pneg %p710
    $region58: #{branch_1_fun.3} parent=5 // pred_check_branch
      %713 = sbr.rel (%p711) target = $region60
    $region59: #{branch_1_fun.3} parent=5 // pred_region
      %s714 = ssub.s32 %s13, 2
      // Predicated region
      $region61: #{branch_1_fun.3} parent=59 // pred_check
        %p715 = pneg %p158
      $region62: #{branch_1_fun.3} parent=59 // pred_check_branch
        %717 = sbr.rel (%p715) target = $region64
      $region63: #{branch_1_fun.3} parent=59 // pred_region
        %p718 = scmp.lt.s32.totalorder %s24, 1
        %s719 = scalar_select %p718, %s24, 1
        %s720 = smul.addr %s719, 8
        %s721 = scalar_lea.vmem %s4, %s720
      $region64: #{branch_1_fun.3} parent=59 // pred_fallthru
        _
      // Predicated region
      $region65: #{branch_1_fun.3} parent=59 // pred_check
        %p722 = pneg %p184
      $region66: #{branch_1_fun.3} parent=59 // pred_check_branch
        %724 = sbr.rel (%p722) target = $region68
      $region67: #{branch_1_fun.3} parent=59 // pred_region
        %p725 = scmp.lt.s32.totalorder %s24, 1
        %s726 = scalar_select %p725, %s24, 1
        %s727 = smul.addr %s726, 2
        %s728 = scalar_lea.vmem %s5, %s727
      $region68: #{branch_1_fun.3} parent=59 // pred_fallthru
        _
      // Predicated region
      $region69: #{branch_1_fun.3} parent=59 // pred_check
        %p729 = pneg %p210
      $region70: #{branch_1_fun.3} parent=59 // pred_check_branch
        %731 = sbr.rel (%p729) target = $region72
      $region71: #{branch_1_fun.3} parent=59 // pred_region
        %p732 = scmp.lt.s32.totalorder %s24, 1
        %s733 = scalar_select %p732, %s24, 1
        %s734 = smul.addr %s733, 2
        %s735 = scalar_lea.vmem %s6, %s734
      $region72: #{branch_1_fun.3} parent=59 // pred_fallthru
        _
    $region60: #{branch_1_fun.3} parent=5 // pred_fallthru
      _
  $region6: #{branch_1_fun.3} parent=0 // loop_footer
    %s17 = sadd.s32 1, %s13
  $region7: #{branch_1_fun.3} parent=0 // loop_footer_branch
    %12 = sbr.rel target = $region3
  $region8: #{branch_1_fun.3} parent=0 // loop_exit
    _

</llo_original>
